<compile_context>
chip_gen: v7x
topology: tpu7x:2x2x1
jax: 0.10.0
libtpu: 0.0.40
codegen_flags: <defaults>
</compile_context>

<pallas_src>
import math

import jax
import jax.numpy as jnp
from jax.experimental import pallas as pl
from jax.experimental.pallas import tpu as pltpu


def _round_up(x: int, m: int) -> int:
    return ((x + m - 1) // m) * m


def mlp_kernel(x_ref, w_ref, b_ref, o_ref):
    # Fused affine layer: logits = x @ Weff + beff (f32 accumulation on the MXU).
    logits = jnp.dot(x_ref[...], w_ref[...], preferred_element_type=jnp.float32)
    logits = logits + b_ref[...]                      # [TM, C_pad] + [1, C_pad] (f32)
    # Numerically stable log_softmax over the lane-padded class axis.  Pad
    # lanes carry a -1e30 bias, so they never win the max and exp() underflows
    # to zero -> they are inert in the sum.
    m = jnp.max(logits, axis=-1, keepdims=True)
    shifted = logits - m
    lse = jnp.log(jnp.sum(jnp.exp(shifted), axis=-1, keepdims=True))
    o_ref[...] = (shifted - lse).astype(o_ref.dtype)


def prepare_mlp_params(w1, b1, w2, b2, *, compute_dtype=jnp.bfloat16):
    """Fuse the two affine layers and lane-pad the class axis.

    Do this ONCE per weight set (cache / jit it); it is pure weight
    preprocessing, not per-token work.
    Returns (w_eff_padded[F, C_pad] in compute_dtype, b_eff_padded[1, C_pad] f32, nclass).
    """
    F, C = w2.shape
    C_pad = _round_up(max(C, 128), 128)

    w1f = w1.astype(jnp.float32)
    w2f = w2.astype(jnp.float32)
    w_eff = w1f @ w2f                                           # [F, C]
    b_eff = b1.reshape(-1).astype(jnp.float32) @ w2f + b2.reshape(-1).astype(jnp.float32)

    NEG = jnp.float32(-1e30)  # inert under log_softmax, avoids inf arithmetic
    w_p = jnp.zeros((F, C_pad), jnp.float32).at[:, :C].set(w_eff)
    b_p = jnp.full((1, C_pad), NEG, jnp.float32).at[0, :C].set(b_eff)
    return w_p.astype(compute_dtype), b_p, C


def mlp_apply(x, w_p, b_p, nclass, *, block_rows=512,
              compute_dtype=jnp.bfloat16, out_dtype=jnp.float32):
    """Apply the fused MLP given pre-fused / pre-padded params."""
    N, F = x.shape
    C_pad = w_p.shape[1]

    # ---- batch tiling --------------------------------------------------------
    N_r8 = _round_up(max(N, 1), 8)
    if N_r8 <= 128:
        TM = N_r8                      # tiny batch: single tile, no padding waste
    else:
        # Aim for >= 4 grid steps (>= 2 per TensorCore on v7x megacore, lets the
        # x/out pipeline double-buffer) but keep tiles >= 128 rows; block_rows
        # defaults to 512 which is near the measured v6e streaming sweet spot.
        TM = min(block_rows, max(128, _round_up(pl.cdiv(N_r8, 4), 8)))
    N_pad = _round_up(N, TM)

    x_c = x.astype(compute_dtype)
    if N_pad != N:
        # Pad only the ragged tail (no full O(N*F) scatter-into-zeros copy).
        x_c = jnp.concatenate(
            [x_c, jnp.zeros((N_pad - N, F), compute_dtype)], axis=0)

    grid = (N_pad // TM,)

    in_itemsize = jnp.dtype(compute_dtype).itemsize
    out_itemsize = jnp.dtype(out_dtype).itemsize
    cost = pl.CostEstimate(
        flops=2 * N_pad * F * C_pad,
        transcendentals=N_pad * (C_pad + 1),
        bytes_accessed=(N_pad * F * in_itemsize          # streamed x
                        + F * C_pad * in_itemsize        # resident fused weight
                        + C_pad * 4                      # resident fused bias (f32)
                        + N_pad * C_pad * out_itemsize), # output writeback
    )

    # Generation-aware VMEM budget: ~3/4 of physical capacity (leaves headroom
    # for compiler scratch + the x/out double buffers on v7x's 64 MiB).
    try:
        vmem_cap = pltpu.get_tpu_info().vmem_capacity_bytes
    except Exception:
        vmem_cap = 64 * 1024 * 1024
    vmem_limit = int(min((vmem_cap * 3) // 4, 100 * 1024 * 1024))

    out = pl.pallas_call(
        mlp_kernel,
        out_shape=jax.ShapeDtypeStruct((N_pad, C_pad), out_dtype),
        grid=grid,
        in_specs=[
            pl.BlockSpec((TM, F), lambda i: (i, 0)),      # stream x by row tiles
            pl.BlockSpec((F, C_pad), lambda i: (0, 0)),   # fused weight, VMEM-resident
            pl.BlockSpec((1, C_pad), lambda i: (0, 0)),   # fused bias, VMEM-resident
        ],
        out_specs=pl.BlockSpec((TM, C_pad), lambda i: (i, 0)),  # lane-dense stores
        compiler_params=pltpu.CompilerParams(
            dimension_semantics=("parallel",),   # shard batch across v7x's 2 TCs
            vmem_limit_bytes=vmem_limit,
        ),
        cost_estimate=cost,
    )(x_c, w_p, b_p)

    # Slice away row padding and class-lane padding.
    return out[:N, :nclass]


def mlp_forward(x, w1, b1, w2, b2, *, block_rows=512,
                compute_dtype=jnp.bfloat16, out_dtype=jnp.float32):
    """x: [N, F], w1: [F, F], b1: [F], w2: [F, C], b2: [C] -> log_softmax [N, C].

    For repeated calls with the same weights, call prepare_mlp_params() once
    and reuse its result with mlp_apply().
    """
    w_p, b_p, nclass = prepare_mlp_params(w1, b1, w2, b2, compute_dtype=compute_dtype)
    return mlp_apply(x, w_p, b_p, nclass, block_rows=block_rows,
                     compute_dtype=compute_dtype, out_dtype=out_dtype)


if __name__ == "__main__":
    # Small shapes consistent with the module: N rows, in_features, nclass.
    N, in_features, nclass = 8, 32, 8

    key = jax.random.PRNGKey(0)
    k_x, k_w1, k_b1, k_w2, k_b2 = jax.random.split(key, 5)

    # Deterministic init mirroring reset_parameters(): stdv is reassigned to
    # 1/sqrt(nclass) before the bias inits, so both biases use stdv2 (matches
    # the original PyTorch code).
    stdv1 = 1.0 / math.sqrt(in_features)
    stdv2 = 1.0 / math.sqrt(nclass)

    x = jax.random.normal(k_x, (N, in_features), dtype=jnp.float32)
    w1 = jax.random.uniform(k_w1, (in_features, in_features),
                            minval=-stdv1, maxval=stdv1, dtype=jnp.float32)
    w2 = jax.random.uniform(k_w2, (in_features, nclass),
                            minval=-stdv2, maxval=stdv2, dtype=jnp.float32)
    b1 = jax.random.uniform(k_b1, (in_features,),
                            minval=-stdv2, maxval=stdv2, dtype=jnp.float32)
    b2 = jax.random.uniform(k_b2, (nclass,),
                            minval=-stdv2, maxval=stdv2, dtype=jnp.float32)

    # Pure-JAX reference = the original (unfused) two-GEMM module in f32.
    ref_logits = (x @ w1 + b1[None, :]) @ w2 + b2[None, :]
    ref = jax.nn.log_softmax(ref_logits, axis=-1)

    # f32 compute path: differs from the reference only by the f32 rounding of
    # the fused (reassociated) GEMM.
    out_f32 = jax.block_until_ready(
        mlp_forward(x, w1, b1, w2, b2, compute_dtype=jnp.float32))
    assert out_f32.shape == (N, nclass), "bad output shape (f32 path)"
    assert jnp.allclose(out_f32, ref, atol=1e-4, rtol=1e-4), "f32 mismatch vs reference"

    # Default bf16 MXU path (native MXU input dtype, f32 accumulation).
    out_bf16 = jax.block_until_ready(mlp_forward(x, w1, b1, w2, b2))
    assert out_bf16.shape == (N, nclass), "bad output shape (bf16 path)"
    assert jnp.allclose(out_bf16, ref, atol=3e-2, rtol=3e-2), "bf16 mismatch vs reference"

    print("KERNEL_OK")
</pallas_src>

<mosaic_0001>
module attributes {stable_mosaic.version = 11 : i64} {
  func.func @mlp_kernel(%arg0: i32, %arg1: memref<8x32xf32, #tpu.memory_space<vmem>>, %arg2: memref<32x128xf32, #tpu.memory_space<vmem>>, %arg3: memref<1x128xf32, #tpu.memory_space<vmem>>, %arg4: memref<8x128xf32, #tpu.memory_space<vmem>>) attributes {dimension_semantics = [#tpu.dimension_semantics<parallel>], iteration_bounds = array<i64: 1>, scalar_prefetch = 0 : i64, scratch_operands = 0 : i64, tpu.core_type = #tpu.core_type<tc>, window_params = [{transform_indices = @transform_0, window_bounds = array<i64: 8, 32>}, {pipeline_mode = #tpu.pipeline_mode<synchronous>, transform_indices = @transform_1, window_bounds = array<i64: 32, 128>}, {pipeline_mode = #tpu.pipeline_mode<synchronous>, transform_indices = @transform_2, window_bounds = array<i64: 1, 128>}, {transform_indices = @transform_3, window_bounds = array<i64: 8, 128>}]} {
    %c0 = arith.constant 0 : index
    %c0_0 = arith.constant 0 : index
    %0 = vector.load %arg1[%c0, %c0_0] : memref<8x32xf32, #tpu.memory_space<vmem>>, vector<8x32xf32>
    %c0_1 = arith.constant 0 : index
    %c0_2 = arith.constant 0 : index
    %1 = vector.load %arg2[%c0_1, %c0_2] : memref<32x128xf32, #tpu.memory_space<vmem>>, vector<32x128xf32>
    %cst = arith.constant dense<0.000000e+00> : vector<8x128xf32>
    %2 = tpu.matmul %0, %1, %cst {dimension_numbers = #tpu.dot_dimension_numbers<[1], [0], [0], [1], [0, 0, 1, 1], [], []>} : vector<8x32xf32>, vector<32x128xf32>, vector<8x128xf32> -> vector<8x128xf32>
    %c0_3 = arith.constant 0 : index
    %c0_4 = arith.constant 0 : index
    %3 = vector.load %arg3[%c0_3, %c0_4] : memref<1x128xf32, #tpu.memory_space<vmem>>, vector<1x128xf32>
    %4 = vector.broadcast %3 : vector<1x128xf32> to vector<8x128xf32>
    %5 = arith.addf %2, %4 : vector<8x128xf32>
    %cst_5 = arith.constant dense<0xFF800000> : vector<8xf32>
    %6 = vector.multi_reduction <maximumf>, %5, %cst_5 [1] : vector<8x128xf32> to vector<8xf32>
    %7 = vector.shape_cast %6 : vector<8xf32> to vector<8x1xf32>
    %8 = vector.broadcast %7 : vector<8x1xf32> to vector<8x128xf32>
    %9 = arith.subf %5, %8 : vector<8x128xf32>
    %10 = math.exp %9 : vector<8x128xf32>
    %cst_6 = arith.constant dense<0.000000e+00> : vector<8xf32>
    %11 = vector.multi_reduction <add>, %10, %cst_6 [1] : vector<8x128xf32> to vector<8xf32>
    %12 = vector.shape_cast %11 : vector<8xf32> to vector<8x1xf32>
    %13 = math.log %12 : vector<8x1xf32>
    %14 = vector.broadcast %13 : vector<8x1xf32> to vector<8x128xf32>
    %15 = arith.subf %9, %14 : vector<8x128xf32>
    %c0_7 = arith.constant 0 : index
    %c0_8 = arith.constant 0 : index
    %16 = vector.load %arg4[%c0_7, %c0_8] : memref<8x128xf32, #tpu.memory_space<vmem>>, vector<8x128xf32>
    tpu.vector_store %arg4[%c0_7, %c0_8], %15 {strides = array<i32>} : memref<8x128xf32, #tpu.memory_space<vmem>>, vector<8x128xf32>,
    return
  }
  func.func @transform_0(%arg0: i32) -> (i32, i32) {
    %c0_i32 = arith.constant 0 : i32
    %c0_i32_0 = arith.constant 0 : i32
    return %arg0, %c0_i32 : i32, i32
  }
  func.func @transform_1(%arg0: i32) -> (i32, i32) {
    %c0_i32 = arith.constant 0 : i32
    %c0_i32_0 = arith.constant 0 : i32
    %c0_i32_1 = arith.constant 0 : i32
    return %c0_i32, %c0_i32_0 : i32, i32
  }
  func.func @transform_2(%arg0: i32) -> (i32, i32) {
    %c0_i32 = arith.constant 0 : i32
    %c0_i32_0 = arith.constant 0 : i32
    %c0_i32_1 = arith.constant 0 : i32
    return %c0_i32, %c0_i32_0 : i32, i32
  }
  func.func @transform_3(%arg0: i32) -> (i32, i32) {
    %c0_i32 = arith.constant 0 : i32
    %c0_i32_0 = arith.constant 0 : i32
    return %arg0, %c0_i32 : i32, i32
  }
}

</mosaic_0001>

<llo_original>
// kernel: tpu_custom_call.1
$region0: #{tpu_custom_call.1}
  #allocation0 [shape = 'u32[]', space=smem, size = 0x4, offset = 0x4, fixed_abs, tag = 'smem constant byte address 0x4 - core index']
  #allocation1 [shape = 'u32[144,128]{1,0:T(1,128)}', space=vmem, size = 0x12000, scoped, tag = 'internal scratch']
  %s0 = inlined_call_operand.hbm [shape: f32[8,32], index: 0, kind: input, shape index: {}]
  %s1 = inlined_call_operand.hbm [shape: f32[32,128], index: 1, kind: input, shape index: {}]
  %s2 = inlined_call_operand.vmem [shape: f32[1,128], index: 2, kind: input, shape index: {}]
  %s3 = inlined_call_operand.hbm [shape: f32[8,128], index: 3, kind: output, shape index: {}]
  %s4 = sld [smem:[#allocation0]]
  $region30: #{tpu_custom_call.1} parent=0
    _
  %s6 = ssub.s32 1, %s4
  %s7 = scalar_select 0, %s6, %s4
  $region1: #{tpu_custom_call.1} parent=0
    #allocation2 [shape = 'u8[4096]{0}', space=vmem, size = 0x1000, scoped, tag = 'input window, operand 0, single buffered']
    #allocation3 [shape = 's32[1]{0}', space=sflag, size = 0x4, scoped, tag = 'scoped memory for tpu_custom_call.1']
    #allocation4 [shape = 's32[1]{0}', space=sflag, size = 0x4, scoped, tag = 'scoped memory for tpu_custom_call.1']
    #allocation5 [shape = 'u8[16384]{0}', space=vmem, size = 0x4000, scoped, tag = 'input window, operand 1, single buffered']
    #allocation6 [shape = 's32[1]{0}', space=sflag, size = 0x4, scoped, tag = 'scoped memory for tpu_custom_call.1']
    #allocation7 [shape = 'u8[4096]{0}', space=vmem, size = 0x1000, scoped, tag = 'output window, operand 0, single buffered']
    %8 = vsyncpa [#allocation3], 0
    %9 = vsyncpa [#allocation6], 0
    %10 = vsyncpa [#allocation4], 0
    // Predicated region
    $region2: #{tpu_custom_call.1} parent=1 // pred_check
      _
    $region3: #{tpu_custom_call.1} parent=1 // pred_check_branch
      %12 = sbr.rel (0) target = $region5
    $region4: #{tpu_custom_call.1} parent=1 // pred_region
      %s14 = ssub.s32 128, 128
      %15 = vsyncadd [#allocation3], %s14
      %s17 = sshll.u32 [#allocation2], 4
      %s18 = int_to_ptr.vmem [resolvable:$true] %s17
      %20 = dma.hbm_to_vmem [thread:$0]  %s0, 128, %s18, [#allocation3]
    $region5: #{tpu_custom_call.1} parent=1 // pred_fallthru
      _
    // Predicated region
    $region6: #{tpu_custom_call.1} parent=1 // pred_check
      _
    $region7: #{tpu_custom_call.1} parent=1 // pred_check_branch
      %22 = sbr.rel (0) target = $region9
    $region8: #{tpu_custom_call.1} parent=1 // pred_region
      %s24 = ssub.s32 512, 512
      %25 = vsyncadd [#allocation6], %s24
      %s26 = sshll.u32 [#allocation5], 4
      %s27 = int_to_ptr.vmem [resolvable:$true] %s26
      %32 = dma.hbm_to_vmem [thread:$0]  %s1, 512, %s27, [#allocation6], 128, 128, 8
    $region9: #{tpu_custom_call.1} parent=1 // pred_fallthru
      _
    // Predicated region
    $region10: #{tpu_custom_call.1} parent=1 // pred_check
      _
    $region11: #{tpu_custom_call.1} parent=1 // pred_check_branch
      %34 = sbr.rel (0) target = $region13
    $region12: #{tpu_custom_call.1} parent=1 // pred_region
      _
    $region13: #{tpu_custom_call.1} parent=1 // pred_fallthru
      _
    // Predicated region
    $region14: #{tpu_custom_call.1} parent=1 // pred_check
      _
    $region15: #{tpu_custom_call.1} parent=1 // pred_check_branch
      %36 = sbr.rel (0) target = $region17
    $region16: #{tpu_custom_call.1} parent=1 // pred_region
      %37 = dma.done [#allocation3], 128
    $region17: #{tpu_custom_call.1} parent=1 // pred_fallthru
      _
    // Predicated region
    $region18: #{tpu_custom_call.1} parent=1 // pred_check
      _
    $region19: #{tpu_custom_call.1} parent=1 // pred_check_branch
      %39 = sbr.rel (0) target = $region21
    $region20: #{tpu_custom_call.1} parent=1 // pred_region
      %40 = dma.done [#allocation6], 512
    $region21: #{tpu_custom_call.1} parent=1 // pred_fallthru
      _
    %v41 = vld [vmem:[#allocation2] sm:$0xff]
    %v42 = vld [vmem:[#allocation5] sm:$0xff]
    %v43 = vld [vmem:[#allocation5 + $0x8] sm:$0xff]
    %v44 = vld [vmem:[#allocation5 + $0x10] sm:$0xff]
    %v45 = vld [vmem:[#allocation5 + $0x18] sm:$0xff]
    %v46 = vld [vmem:[%s2] sm:$0x1]
    %v48 = vlaneseq
    %v49 = vshrl.u32 %v48, 7
    %v50 = vsub.s32 0, %v49
    %v51 = vrot.slane %v46, %v50
    %vm53 = vcmask 261120
    %v55 = vsel %vm53, %v41, 0
    %57 = vmatprep.subr.mxu0 0.0
    %58 = vmatpush1.msra.mxu0 %v42
    %59 = vmatprep.subr.mxu0 0.0
    %60 = vmatpush1.msra.mxu0 %v43
    %61 = vmatprep.subr.mxu0 0.0
    %62 = vmatpush1.msra.mxu0 %v44
    %63 = vmatprep.subr.mxu0 0.0
    %64 = vmatpush1.msra.mxu0 %v45
    %65 = vmatprep.subr.mxu0 0.0
    %66 = vmatpush1.msra.mxu0 0.0
    %67 = vmatprep.subr.mxu0 0.0
    %68 = vmatpush1.msra.mxu0 0.0
    %69 = vmatprep.subr.mxu0 0.0
    %70 = vmatpush1.msra.mxu0 0.0
    %71 = vmatprep.subr.mxu0 0.0
    %72 = vmatpush1.msra.mxu0 0.0
    %73 = vmatprep.subr.mxu0 0.0
    %74 = vmatpush1.msra.mxu0 0.0
    %75 = vmatprep.subr.mxu0 0.0
    %76 = vmatpush1.msra.mxu0 0.0
    %77 = vmatprep.subr.mxu0 0.0
    %78 = vmatpush1.msra.mxu0 0.0
    %79 = vmatprep.subr.mxu0 0.0
    %80 = vmatpush1.msra.mxu0 0.0
    %81 = vmatprep.subr.mxu0 0.0
    %82 = vmatpush1.msra.mxu0 0.0
    %83 = vmatprep.subr.mxu0 0.0
    %84 = vmatpush1.msra.mxu0 0.0
    %85 = vmatprep.subr.mxu0 0.0
    %86 = vmatpush1.msra.mxu0 0.0
    %87 = vmatprep.subr.mxu0 0.0
    %88 = vmatpush1.msra.mxu0 0.0
    %89 = vmatprep.subr.mxu0 0.0
    %90 = vmatpush1.msra.mxu0 0.0
    %91 = vmatprep.subr.mxu0 0.0
    %92 = vmatpush1.msra.mxu0 0.0
    %93 = vmatprep.subr.mxu0 0.0
    %94 = vmatpush1.msra.mxu0 0.0
    %95 = vmatprep.subr.mxu0 0.0
    %96 = vmatpush1.msra.mxu0 0.0
    %97 = vmatprep.subr.mxu0 0.0
    %98 = vmatpush1.msra.mxu0 0.0
    %99 = vmatprep.subr.mxu0 0.0
    %100 = vmatpush1.msra.mxu0 0.0
    %101 = vmatprep.subr.mxu0 0.0
    %102 = vmatpush1.msra.mxu0 0.0
    %103 = vmatprep.subr.mxu0 0.0
    %104 = vmatpush1.msra.mxu0 0.0
    %105 = vmatprep.subr.mxu0 0.0
    %106 = vmatpush1.msra.mxu0 0.0
    %107 = vmatprep.subr.mxu0 0.0
    %108 = vmatpush1.msra.mxu0 0.0
    %109 = vmatprep.subr.mxu0 0.0
    %110 = vmatpush1.msra.mxu0 0.0
    %111 = vmatprep.subr.mxu0 0.0
    %112 = vmatpush1.msra.mxu0 0.0
    %113 = vmatprep.subr.mxu0 0.0
    %114 = vmatpush1.msra.mxu0 0.0
    %115 = vmatprep.subr.mxu0 0.0
    %116 = vmatpush1.msra.mxu0 0.0
    %117 = vmatprep.subr.mxu0 0.0
    %118 = vmatpush1.msra.mxu0 0.0
    %119 = vmatprep.subr.mxu0 0.0
    %120 = vmatpush1.msra.mxu0 0.0
    %121 = vmatprep.mubr.f32.mxu0 0.0
    %122 = vmatmul.mubr.f32.gmra.mrb[0].mxu0 %v55
    %v123 = vpop.f32.mrb[0].mxu0
    %v124 = vadd.f32 %v51, %v123
    %v125 = vpop.f32.mrb[0].mxu0
    %126 = vdwg.mxu0
    %127 = vmax.xlane.f32.xlu0 %v124
    %v128 = vpop.xlane.xlu0 %127
    %v129 = vsub.f32 %v124, %v128
    %v130 = vmul.f32 %v129, 1.442695
    %v131 = vpow.pop %v130
    %132 = vadd.xlane.f32.xlu0 %v131
    %v133 = vpop.xlane.xlu0 %132
    %v134 = vlog2.pop %v133
    %v135 = vmul.f32 %v134, 0.6931472
    %v136 = vsub.f32 %v129, %v135
    %137 = vst [vmem:[#allocation7] sm:$0xff] %v136
    // Predicated region
    $region22: #{tpu_custom_call.1} parent=1 // pred_check
      _
    $region23: #{tpu_custom_call.1} parent=1 // pred_check_branch
      %139 = sbr.rel (0) target = $region25
    $region24: #{tpu_custom_call.1} parent=1 // pred_region
      %s141 = ssub.s32 128, 128
      %142 = vsyncadd [#allocation4], %s141
      %s144 = sshll.u32 [#allocation7], 4
      %s145 = int_to_ptr.vmem [resolvable:$true] %s144
      %147 = dma.vmem_to_hbm [thread:$0]  %s145, 128, %s3, [#allocation4]
    $region25: #{tpu_custom_call.1} parent=1 // pred_fallthru
      _
    // Predicated region
    $region26: #{tpu_custom_call.1} parent=1 // pred_check
      _
    $region27: #{tpu_custom_call.1} parent=1 // pred_check_branch
      %149 = sbr.rel (0) target = $region29
    $region28: #{tpu_custom_call.1} parent=1 // pred_region
      %150 = dma.done [#allocation4], 128
    $region29: #{tpu_custom_call.1} parent=1 // pred_fallthru
      _
    %151 = vsyncpa [#allocation3], 1
    %152 = vsyncpa [#allocation6], 1
    %153 = vsyncpa [#allocation4], 1

</llo_original>
